<compile_context>
chip_gen: v5e
topology: v5e:2x2
jax: 0.10.0
libtpu: 0.0.40
codegen_flags: <defaults>
</compile_context>

<pallas_src>
import math

import jax
import jax.numpy as jnp
from jax.experimental import pallas as pl
from jax.experimental.pallas import tpu as pltpu

_LANE_CANDIDATES = (1024, 512, 256, 128)
_MIN_GRID_STEPS = 8              # keep a few pipelined steps for megacore sharding
_MIN_SPLIT_BLOCK_BYTES = 1 << 20  # only split further if blocks stay >= 1 MiB


def _round_down(x, m):
    return (x // m) * m


def _round_up(x, m):
    return -(-x // m) * m


def _vmem_physical_bytes():
    """Physical VMEM per TensorCore (64 MiB on v7x, 128 MiB on v5e/v6e)."""
    try:
        cap = getattr(pltpu.get_tpu_info(), "vmem_capacity_bytes", None)
        if cap:
            return int(cap)
    except Exception:
        pass
    try:
        kind = jax.devices()[0].device_kind.lower()
        if "v7" in kind or "7x" in kind:
            return 64 << 20
        return 128 << 20
    except Exception:
        return 64 << 20  # conservative (v7x-sized) default


def _make_branch_kernel(num_branches):
    def kernel(w_ref, *refs):
        # w_ref : SMEM f32[num_branches] (Gumbel-softmax weights, scalars).
        # refs[:M] : VMEM [tile_rows, lane] branch tiles.
        # refs[M]  : VMEM [tile_rows, lane] output tile.
        x_refs = refs[:num_branches]
        out_ref = refs[num_branches]
        acc = x_refs[0][...].astype(jnp.float32) * w_ref[0]
        for i in range(1, num_branches):
            acc = acc + x_refs[i][...].astype(jnp.float32) * w_ref[i]
        out_ref[...] = acc.astype(out_ref.dtype)

    return kernel


def gumbel_softmax_weights(prob, temp, key):
    """F.gumbel_softmax(prob, tau=temp, hard=False), using jax.random."""
    g = jax.random.gumbel(key, prob.shape, dtype=jnp.float32)
    return jax.nn.softmax((prob.astype(jnp.float32) + g) / jnp.float32(temp))


def branch_combine(outs, weights):
    """outcomb = sum_i outs[i] * weights[i], via a tiled Pallas TPU kernel."""
    num_branches = len(outs)
    shape = outs[0].shape
    dtype = outs[0].dtype
    itemsize = jnp.dtype(dtype).itemsize

    total = math.prod(shape)

    # ---- lane-dense 2D layout: [rows, lane], lane a multiple of 128 ----------
    if total % 128 == 0:
        padded_total = total
    else:
        padded_total = _round_up(total, 8 * 128)
    lane = max(l for l in _LANE_CANDIDATES if padded_total % l == 0)
    rows = padded_total // lane

    if padded_total != total:
        pad = padded_total - total
        xs = [jnp.pad(o.reshape(-1), (0, pad)).reshape(rows, lane) for o in outs]
    else:
        xs = [o.reshape(rows, lane) for o in outs]  # free reshapes (contiguous)

    # ---- tile sizing from per-generation VMEM budget -------------------------
    vmem_phys = _vmem_physical_bytes()
    budget = (vmem_phys * 5) // 8              # ~40 MiB on v7x, ~80 MiB on v5e/v6e
    denom = 2 * (num_branches + 1) * lane * itemsize  # double-buffered streams
    tile_rows = max(8, _round_down(budget // denom, 8))
    if rows >= _MIN_GRID_STEPS * 8:
        cap = max(8, _round_up(-(-rows // _MIN_GRID_STEPS), 8))
        if cap * lane * itemsize >= _MIN_SPLIT_BLOCK_BYTES:
            tile_rows = min(tile_rows, cap)
    tile_rows = min(tile_rows, rows)
    if tile_rows < rows:
        tile_rows = max(8, _round_down(tile_rows, 8))

    grid = (pl.cdiv(rows, tile_rows),)
    working_set = 2 * (num_branches + 1) * tile_rows * lane * itemsize
    vmem_limit = int(min(vmem_phys - (8 << 20),
                         max(budget, working_set + (2 << 20))))

    data_spec = pl.BlockSpec((tile_rows, lane), lambda i: (i, 0))
    cost = pl.CostEstimate(
        flops=2 * num_branches * padded_total,
        transcendentals=0,
        bytes_accessed=(num_branches + 1) * padded_total * itemsize,
    )

    out2d = pl.pallas_call(
        _make_branch_kernel(num_branches),
        out_shape=jax.ShapeDtypeStruct((rows, lane), dtype),
        grid=grid,
        in_specs=[pl.BlockSpec(memory_space=pltpu.MemorySpace.SMEM)]
        + [data_spec] * num_branches,
        out_specs=data_spec,
        compiler_params=pltpu.CompilerParams(
            dimension_semantics=("parallel",),
            vmem_limit_bytes=vmem_limit),
        cost_estimate=cost,
    )(weights.astype(jnp.float32), *xs)

    if padded_total != total:
        return out2d.reshape(-1)[:total].reshape(shape)
    return out2d.reshape(shape)


def branch_layer_forward(outs, prob, temp, key):
    """Full BranchLayer.forward: gumbel-softmax weights + weighted branch sum."""
    weights = gumbel_softmax_weights(prob, temp, key)
    return branch_combine(outs, weights), weights


if __name__ == "__main__":
    key = jax.random.PRNGKey(0)
    k_noise, k_data = jax.random.split(key)

    # --- Small demo: num_ins=4 branches, each [B=2, T=8, H=32] ---------------
    num_ins, B, T, H = 4, 2, 8, 32
    xk = jax.random.split(k_data, num_ins)
    outs = [jax.random.normal(xk[i], (B, T, H), dtype=jnp.float32)
            for i in range(num_ins)]
    prob = jnp.ones((num_ins,), jnp.float32)  # BranchLayer.__init__: torch.ones(num_ins)
    temp = 0.7

    outcomb, weights = branch_layer_forward(outs, prob, temp, k_noise)
    outcomb = jax.block_until_ready(outcomb)

    ref = jnp.zeros_like(outs[0])
    for i, o in enumerate(outs):
        ref = ref + o * weights[i]
    assert outcomb.shape == (B, T, H)
    assert jnp.allclose(outcomb, ref, atol=1e-5, rtol=1e-5)

    # --- Larger check exercising the lane-dense / tiled path -----------------
    num_ins2 = 3
    xk2 = jax.random.split(jax.random.PRNGKey(1), num_ins2)
    outs2 = [jax.random.normal(xk2[i], (16, 128, 128), dtype=jnp.float32)
             for i in range(num_ins2)]
    weights2 = gumbel_softmax_weights(jnp.ones((num_ins2,), jnp.float32), 1.0,
                                      jax.random.PRNGKey(2))
    out2 = jax.block_until_ready(branch_combine(outs2, weights2))
    ref2 = outs2[0] * weights2[0]
    for i in range(1, num_ins2):
        ref2 = ref2 + outs2[i] * weights2[i]
    assert jnp.allclose(out2, ref2, atol=1e-5, rtol=1e-5)

    # --- Non-multiple-of-128 element count: pad + slice path -----------------
    num_ins3 = 2
    xk3 = jax.random.split(jax.random.PRNGKey(3), num_ins3)
    outs3 = [jax.random.normal(xk3[i], (2, 7, 33), dtype=jnp.float32)
             for i in range(num_ins3)]
    weights3 = gumbel_softmax_weights(jnp.ones((num_ins3,), jnp.float32), 0.5,
                                      jax.random.PRNGKey(4))
    out3 = jax.block_until_ready(branch_combine(outs3, weights3))
    ref3 = outs3[0] * weights3[0] + outs3[1] * weights3[1]
    assert out3.shape == (2, 7, 33)
    assert jnp.allclose(out3, ref3, atol=1e-5, rtol=1e-5)

    print("KERNEL_OK")
</pallas_src>

<mosaic_0001>
module attributes {stable_mosaic.version = 11 : i64} {
  func.func @kernel(%arg0: i32, %arg1: memref<4xf32, #tpu.memory_space<smem>>, %arg2: memref<1x512xf32, #tpu.memory_space<vmem>>, %arg3: memref<1x512xf32, #tpu.memory_space<vmem>>, %arg4: memref<1x512xf32, #tpu.memory_space<vmem>>, %arg5: memref<1x512xf32, #tpu.memory_space<vmem>>, %arg6: memref<1x512xf32, #tpu.memory_space<vmem>>) attributes {dimension_semantics = [#tpu.dimension_semantics<parallel>], iteration_bounds = array<i64: 1>, scalar_prefetch = 0 : i64, scratch_operands = 0 : i64, tpu.core_type = #tpu.core_type<tc>, window_params = [{transform_indices = @transform_0, window_bounds = array<i64: 4>}, {transform_indices = @transform_1, window_bounds = array<i64: 1, 512>}, {transform_indices = @transform_2, window_bounds = array<i64: 1, 512>}, {transform_indices = @transform_3, window_bounds = array<i64: 1, 512>}, {transform_indices = @transform_4, window_bounds = array<i64: 1, 512>}, {transform_indices = @transform_5, window_bounds = array<i64: 1, 512>}]} {
    %c0 = arith.constant 0 : index
    %c0_0 = arith.constant 0 : index
    %0 = vector.load %arg2[%c0, %c0_0] : memref<1x512xf32, #tpu.memory_space<vmem>>, vector<1x512xf32>
    %c0_1 = arith.constant 0 : index
    %1 = memref.load %arg1[%c0_1] : memref<4xf32, #tpu.memory_space<smem>>
    %2 = vector.broadcast %1 : f32 to vector<1x512xf32>
    %3 = arith.mulf %0, %2 : vector<1x512xf32>
    %c0_2 = arith.constant 0 : index
    %c0_3 = arith.constant 0 : index
    %4 = vector.load %arg3[%c0_2, %c0_3] : memref<1x512xf32, #tpu.memory_space<vmem>>, vector<1x512xf32>
    %c1 = arith.constant 1 : index
    %5 = memref.load %arg1[%c1] : memref<4xf32, #tpu.memory_space<smem>>
    %6 = vector.broadcast %5 : f32 to vector<1x512xf32>
    %7 = arith.mulf %4, %6 : vector<1x512xf32>
    %8 = arith.addf %3, %7 : vector<1x512xf32>
    %c0_4 = arith.constant 0 : index
    %c0_5 = arith.constant 0 : index
    %9 = vector.load %arg4[%c0_4, %c0_5] : memref<1x512xf32, #tpu.memory_space<vmem>>, vector<1x512xf32>
    %c2 = arith.constant 2 : index
    %10 = memref.load %arg1[%c2] : memref<4xf32, #tpu.memory_space<smem>>
    %11 = vector.broadcast %10 : f32 to vector<1x512xf32>
    %12 = arith.mulf %9, %11 : vector<1x512xf32>
    %13 = arith.addf %8, %12 : vector<1x512xf32>
    %c0_6 = arith.constant 0 : index
    %c0_7 = arith.constant 0 : index
    %14 = vector.load %arg5[%c0_6, %c0_7] : memref<1x512xf32, #tpu.memory_space<vmem>>, vector<1x512xf32>
    %c3 = arith.constant 3 : index
    %15 = memref.load %arg1[%c3] : memref<4xf32, #tpu.memory_space<smem>>
    %16 = vector.broadcast %15 : f32 to vector<1x512xf32>
    %17 = arith.mulf %14, %16 : vector<1x512xf32>
    %18 = arith.addf %13, %17 : vector<1x512xf32>
    %c0_8 = arith.constant 0 : index
    %c0_9 = arith.constant 0 : index
    %19 = vector.load %arg6[%c0_8, %c0_9] : memref<1x512xf32, #tpu.memory_space<vmem>>, vector<1x512xf32>
    tpu.vector_store %arg6[%c0_8, %c0_9], %18 {strides = array<i32>} : memref<1x512xf32, #tpu.memory_space<vmem>>, vector<1x512xf32>,
    return
  }
  func.func @transform_0(%arg0: i32) -> i32 {
    %c0_i32 = arith.constant 0 : i32
    %c0_i32_0 = arith.constant 0 : i32
    return %c0_i32 : i32
  }
  func.func @transform_1(%arg0: i32) -> (i32, i32) {
    %c0_i32 = arith.constant 0 : i32
    %c0_i32_0 = arith.constant 0 : i32
    return %arg0, %c0_i32 : i32, i32
  }
  func.func @transform_2(%arg0: i32) -> (i32, i32) {
    %c0_i32 = arith.constant 0 : i32
    %c0_i32_0 = arith.constant 0 : i32
    return %arg0, %c0_i32 : i32, i32
  }
  func.func @transform_3(%arg0: i32) -> (i32, i32) {
    %c0_i32 = arith.constant 0 : i32
    %c0_i32_0 = arith.constant 0 : i32
    return %arg0, %c0_i32 : i32, i32
  }
  func.func @transform_4(%arg0: i32) -> (i32, i32) {
    %c0_i32 = arith.constant 0 : i32
    %c0_i32_0 = arith.constant 0 : i32
    return %arg0, %c0_i32 : i32, i32
  }
  func.func @transform_5(%arg0: i32) -> (i32, i32) {
    %c0_i32 = arith.constant 0 : i32
    %c0_i32_0 = arith.constant 0 : i32
    return %arg0, %c0_i32 : i32, i32
  }
}

</mosaic_0001>

<llo_original>
// kernel: tpu_custom_call.1
$region0: #{tpu_custom_call.1}
  #allocation0 [shape = 'u32[]', space=smem, size = 0x4, offset = 0x4, fixed_abs, tag = 'smem constant byte address 0x4 - core index']
  #allocation1 [shape = 'u32[72,128]{1,0:T(1,128)}', space=vmem, size = 0x9000, scoped, tag = 'internal scratch']
  %s0 = inlined_call_operand.hbm [shape: f32[4], index: 0, kind: input, shape index: {}]
  %s1 = inlined_call_operand.hbm [shape: f32[1,512], index: 1, kind: input, shape index: {}]
  %s2 = inlined_call_operand.hbm [shape: f32[1,512], index: 2, kind: input, shape index: {}]
  %s3 = inlined_call_operand.hbm [shape: f32[1,512], index: 3, kind: input, shape index: {}]
  %s4 = inlined_call_operand.hbm [shape: f32[1,512], index: 4, kind: input, shape index: {}]
  %s5 = inlined_call_operand.hbm [shape: f32[1,512], index: 5, kind: output, shape index: {}]
  %s6 = sld [smem:[#allocation0]]
  $region50: #{tpu_custom_call.1} parent=0
    _
  %s8 = ssub.s32 1, %s6
  %s9 = scalar_select 0, %s8, %s6
  $region1: #{tpu_custom_call.1} parent=0
    #allocation2 [shape = 'u8[512]{0}', space=smem, size = 0x200, scoped, tag = 'input window, operand 0, single buffered']
    #allocation3 [shape = 's32[1]{0}', space=sflag, size = 0x4, scoped, tag = 'scoped memory for tpu_custom_call.1']
    #allocation4 [shape = 's32[1]{0}', space=sflag, size = 0x4, scoped, tag = 'scoped memory for tpu_custom_call.1']
    #allocation5 [shape = 's32[1]{0}', space=sflag, size = 0x4, scoped, tag = 'scoped memory for tpu_custom_call.1']
    #allocation6 [shape = 'u8[2048]{0}', space=vmem, size = 0x800, scoped, tag = 'input window, operand 1, single buffered']
    #allocation7 [shape = 'u8[2048]{0}', space=vmem, size = 0x800, scoped, tag = 'input window, operand 2, single buffered']
    #allocation8 [shape = 's32[1]{0}', space=sflag, size = 0x4, scoped, tag = 'scoped memory for tpu_custom_call.1']
    #allocation9 [shape = 'u8[2048]{0}', space=vmem, size = 0x800, scoped, tag = 'input window, operand 3, single buffered']
    #allocation10 [shape = 'u8[2048]{0}', space=vmem, size = 0x800, scoped, tag = 'input window, operand 4, single buffered']
    #allocation11 [shape = 's32[1]{0}', space=sflag, size = 0x4, scoped, tag = 'scoped memory for tpu_custom_call.1']
    #allocation12 [shape = 'u8[2048]{0}', space=vmem, size = 0x800, scoped, tag = 'output window, operand 0, single buffered']
    %10 = vsyncpa [#allocation5], 0
    %11 = vsyncpa [#allocation3], 0
    %12 = vsyncpa [#allocation8], 0
    %13 = vsyncpa [#allocation11], 0
    %14 = vsyncpa [#allocation4], 0
    // Predicated region
    $region2: #{tpu_custom_call.1} parent=1 // pred_check
      _
    $region3: #{tpu_custom_call.1} parent=1 // pred_check_branch
      %16 = sbr.rel (0) target = $region5
    $region4: #{tpu_custom_call.1} parent=1 // pred_region
      %18 = vsyncadd [#allocation5], 0
      %s20 = sshll.u32 %s0, 4
      %s21 = int_to_ptr.hbm [resolvable:$true] %s20
      %23 = dma.hbm_to_smem %s21, 16, [#allocation2], [#allocation5]
    $region5: #{tpu_custom_call.1} parent=1 // pred_fallthru
      _
    // Predicated region
    $region6: #{tpu_custom_call.1} parent=1 // pred_check
      _
    $region7: #{tpu_custom_call.1} parent=1 // pred_check_branch
      %25 = sbr.rel (0) target = $region9
    $region8: #{tpu_custom_call.1} parent=1 // pred_region
      %27 = vsyncadd [#allocation3], 0
      %s29 = sshll.u32 %s1, 4
      %s30 = int_to_ptr.hbm [resolvable:$true] %s29
      %s31 = sshll.u32 [#allocation6], 4
      %s32 = int_to_ptr.vmem [resolvable:$true] %s31
      %34 = dma.hbm_to_vmem [thread:$0]  %s30, 64, %s32, [#allocation3]
    $region9: #{tpu_custom_call.1} parent=1 // pred_fallthru
      _
    // Predicated region
    $region10: #{tpu_custom_call.1} parent=1 // pred_check
      _
    $region11: #{tpu_custom_call.1} parent=1 // pred_check_branch
      %36 = sbr.rel (0) target = $region13
    $region12: #{tpu_custom_call.1} parent=1 // pred_region
      %38 = vsyncadd [#allocation8], 0
      %s40 = sshll.u32 %s2, 4
      %s41 = int_to_ptr.hbm [resolvable:$true] %s40
      %s42 = sshll.u32 [#allocation7], 4
      %s43 = int_to_ptr.vmem [resolvable:$true] %s42
      %45 = dma.hbm_to_vmem [thread:$0]  %s41, 64, %s43, [#allocation8]
    $region13: #{tpu_custom_call.1} parent=1 // pred_fallthru
      _
    // Predicated region
    $region14: #{tpu_custom_call.1} parent=1 // pred_check
      _
    $region15: #{tpu_custom_call.1} parent=1 // pred_check_branch
      %47 = sbr.rel (0) target = $region17
    $region16: #{tpu_custom_call.1} parent=1 // pred_region
      %49 = vsyncadd [#allocation8], 0
      %s51 = sshll.u32 %s3, 4
      %s52 = int_to_ptr.hbm [resolvable:$true] %s51
      %s53 = sshll.u32 [#allocation9], 4
      %s54 = int_to_ptr.vmem [resolvable:$true] %s53
      %56 = dma.hbm_to_vmem [thread:$0]  %s52, 64, %s54, [#allocation8]
    $region17: #{tpu_custom_call.1} parent=1 // pred_fallthru
      _
    // Predicated region
    $region18: #{tpu_custom_call.1} parent=1 // pred_check
      _
    $region19: #{tpu_custom_call.1} parent=1 // pred_check_branch
      %58 = sbr.rel (0) target = $region21
    $region20: #{tpu_custom_call.1} parent=1 // pred_region
      %60 = vsyncadd [#allocation11], 0
      %s62 = sshll.u32 %s4, 4
      %s63 = int_to_ptr.hbm [resolvable:$true] %s62
      %s64 = sshll.u32 [#allocation10], 4
      %s65 = int_to_ptr.vmem [resolvable:$true] %s64
      %67 = dma.hbm_to_vmem [thread:$0]  %s63, 64, %s65, [#allocation11]
    $region21: #{tpu_custom_call.1} parent=1 // pred_fallthru
      _
    // Predicated region
    $region22: #{tpu_custom_call.1} parent=1 // pred_check
      _
    $region23: #{tpu_custom_call.1} parent=1 // pred_check_branch
      %69 = sbr.rel (0) target = $region25
    $region24: #{tpu_custom_call.1} parent=1 // pred_region
      %71 = dma.done [#allocation5], 16
    $region25: #{tpu_custom_call.1} parent=1 // pred_fallthru
      _
    // Predicated region
    $region26: #{tpu_custom_call.1} parent=1 // pred_check
      _
    $region27: #{tpu_custom_call.1} parent=1 // pred_check_branch
      %73 = sbr.rel (0) target = $region29
    $region28: #{tpu_custom_call.1} parent=1 // pred_region
      %75 = dma.done [#allocation3], 64
    $region29: #{tpu_custom_call.1} parent=1 // pred_fallthru
      _
    // Predicated region
    $region30: #{tpu_custom_call.1} parent=1 // pred_check
      _
    $region31: #{tpu_custom_call.1} parent=1 // pred_check_branch
      %77 = sbr.rel (0) target = $region33
    $region32: #{tpu_custom_call.1} parent=1 // pred_region
      %79 = dma.done [#allocation8], 64
    $region33: #{tpu_custom_call.1} parent=1 // pred_fallthru
      _
    // Predicated region
    $region34: #{tpu_custom_call.1} parent=1 // pred_check
      _
    $region35: #{tpu_custom_call.1} parent=1 // pred_check_branch
      %81 = sbr.rel (0) target = $region37
    $region36: #{tpu_custom_call.1} parent=1 // pred_region
      %83 = dma.done [#allocation8], 64
    $region37: #{tpu_custom_call.1} parent=1 // pred_fallthru
      _
    // Predicated region
    $region38: #{tpu_custom_call.1} parent=1 // pred_check
      _
    $region39: #{tpu_custom_call.1} parent=1 // pred_check_branch
      %85 = sbr.rel (0) target = $region41
    $region40: #{tpu_custom_call.1} parent=1 // pred_region
      %87 = dma.done [#allocation11], 64
    $region41: #{tpu_custom_call.1} parent=1 // pred_fallthru
      _
    %88 = sfence
    %v89 = vld [vmem:[#allocation6] sm:$0xf]
    %s90 = sld [smem:[#allocation2]]
    %v91 = vstv %s90
    %v92 = vmul.f32 %v89, %v91
    %v93 = vld [vmem:[#allocation7] sm:$0xf]
    %s94 = sld [smem:[#allocation2 + $0x1]]
    %v95 = vstv %s94
    %v96 = vmul.f32 %v93, %v95
    %v97 = vadd.f32 %v92, %v96
    %v98 = vld [vmem:[#allocation9] sm:$0xf]
    %s99 = sld [smem:[#allocation2 + $0x2]]
    %v100 = vstv %s99
    %v101 = vmul.f32 %v98, %v100
    %v102 = vadd.f32 %v97, %v101
    %v103 = vld [vmem:[#allocation10] sm:$0xf]
    %s104 = sld [smem:[#allocation2 + $0x3]]
    %v105 = vstv %s104
    %v106 = vmul.f32 %v103, %v105
    %v107 = vadd.f32 %v102, %v106
    %v108 = vlaneseq
    %vm109 = vcmp.ge.s32.totalorder %v108, 0
    %vm110 = vcmp.lt.s32.totalorder %v108, 512
    %vm111 = vmand %vm109, %vm110
    %112 = vst.msk [vmem:[#allocation12] sm:$0xf] %vm111, %v107
    // Predicated region
    $region42: #{tpu_custom_call.1} parent=1 // pred_check
      _
    $region43: #{tpu_custom_call.1} parent=1 // pred_check_branch
      %114 = sbr.rel (0) target = $region45
    $region44: #{tpu_custom_call.1} parent=1 // pred_region
      %116 = vsyncadd [#allocation4], 0
      %s118 = sshll.u32 [#allocation12], 4
      %s119 = int_to_ptr.vmem [resolvable:$true] %s118
      %s120 = sshll.u32 %s5, 4
      %s121 = int_to_ptr.hbm [resolvable:$true] %s120
      %123 = dma.vmem_to_hbm [thread:$0]  %s119, 64, %s121, [#allocation4]
    $region45: #{tpu_custom_call.1} parent=1 // pred_fallthru
      _
    // Predicated region
    $region46: #{tpu_custom_call.1} parent=1 // pred_check
      _
    $region47: #{tpu_custom_call.1} parent=1 // pred_check_branch
      %125 = sbr.rel (0) target = $region49
    $region48: #{tpu_custom_call.1} parent=1 // pred_region
      %127 = dma.done [#allocation4], 64
    $region49: #{tpu_custom_call.1} parent=1 // pred_fallthru
      _
    %128 = vsyncpa [#allocation3], 1
    %129 = vsyncpa [#allocation8], 1
    %130 = vsyncpa [#allocation11], 1
    %131 = vsyncpa [#allocation4], 1
    %132 = vsyncpa [#allocation5], 1

</llo_original>
